<compile_context>
chip_gen: v7x
topology: tpu7x:2x2x1
jax: 0.10.0
libtpu: 0.0.40
codegen_flags: <defaults>
</compile_context>

<pallas_src>
import jax
import jax.numpy as jnp
from jax.experimental import pallas as pl
from jax.experimental.pallas import tpu as pltpu


def mlp_kernel(x_ref, w1_ref, b1_ref, w2_ref, b2_ref, o_ref):
    # fc1: [TB, I] (bf16) @ [I, H] (bf16) -> f32 accum, + bias
    h = jnp.dot(x_ref[...], w1_ref[...], preferred_element_type=jnp.float32)
    h = h + b1_ref[...]
    # dropout (eval mode) == identity, then relu
    h = jnp.maximum(h, 0.0)
    # fc2: [TB, H] (bf16) @ [H, O] (bf16) -> f32 accum, + bias
    out = jnp.dot(h.astype(jnp.bfloat16), w2_ref[...],
                  preferred_element_type=jnp.float32)
    out = out + b2_ref[...]
    o_ref[...] = out.astype(o_ref.dtype)


def _round_up(n, m):
    return ((n + m - 1) // m) * m


def net_forward(x, w1, b1, w2, b2, *, block_b=512):
    """Forward pass of Net (eval mode).

    x:  [B, I] f32
    w1: [I, H] f32   b1: [1, H] f32   (stored transposed vs. PyTorch [out, in])
    w2: [H, O] f32   b2: [1, O] f32
    Returns [B, O] f32.
    """
    B, I = x.shape
    H = w1.shape[1]
    O = w2.shape[1]

    LANE, SUB = 128, 8

    # Pad feature dims to lane multiples (zero padding is inert: zero weights,
    # zero biases, relu(0)=0, and padded outputs are sliced off).
    I_pad = _round_up(max(I, LANE), LANE)
    H_pad = _round_up(max(H, LANE), LANE)
    O_pad = _round_up(max(O, LANE), LANE)

    # Batch tile: multiple of 8 sublanes, capped at block_b.
    TB = min(_round_up(B, SUB), _round_up(block_b, SUB))
    B_pad = _round_up(B, TB)

    # Pre-pad / cast inputs (outside the kernel).
    xp = jnp.zeros((B_pad, I_pad), jnp.bfloat16).at[:B, :I].set(
        x.astype(jnp.bfloat16))
    w1p = jnp.zeros((I_pad, H_pad), jnp.bfloat16).at[:I, :H].set(
        w1.astype(jnp.bfloat16))
    b1p = jnp.zeros((1, H_pad), jnp.float32).at[:, :H].set(b1)
    w2p = jnp.zeros((H_pad, O_pad), jnp.bfloat16).at[:H, :O].set(
        w2.astype(jnp.bfloat16))
    b2p = jnp.zeros((1, O_pad), jnp.float32).at[:, :O].set(b2)

    grid = (B_pad // TB,)

    out = pl.pallas_call(
        mlp_kernel,
        out_shape=jax.ShapeDtypeStruct((B_pad, O_pad), jnp.float32),
        grid=grid,
        in_specs=[
            # x streams over the batch grid axis.
            pl.BlockSpec((TB, I_pad), lambda i: (i, 0)),
            # Weights / biases: constant block index -> VMEM-resident.
            pl.BlockSpec((I_pad, H_pad), lambda i: (0, 0)),
            pl.BlockSpec((1, H_pad), lambda i: (0, 0)),
            pl.BlockSpec((H_pad, O_pad), lambda i: (0, 0)),
            pl.BlockSpec((1, O_pad), lambda i: (0, 0)),
        ],
        out_specs=pl.BlockSpec((TB, O_pad), lambda i: (i, 0)),
        compiler_params=pltpu.CompilerParams(
            # Batch tiles are independent -> shard across TCs on v7x.
            dimension_semantics=("parallel",),
        ),
    )(xp, w1p, b1p, w2p, b2p)

    return out[:B, :O]


def init_params(key, input_size, output_size, hidden_size=128):
    """Deterministic init mimicking nn.Linear's uniform(-1/sqrt(fan_in), ...)."""
    k1, k2, k3, k4 = jax.random.split(key, 4)
    bound1 = 1.0 / jnp.sqrt(input_size)
    bound2 = 1.0 / jnp.sqrt(hidden_size)
    # Stored transposed relative to PyTorch's [out, in] so the kernel does x @ W.
    w1 = jax.random.uniform(k1, (input_size, hidden_size), jnp.float32, -bound1, bound1)
    b1 = jax.random.uniform(k2, (1, hidden_size), jnp.float32, -bound1, bound1)
    w2 = jax.random.uniform(k3, (hidden_size, output_size), jnp.float32, -bound2, bound2)
    b2 = jax.random.uniform(k4, (1, output_size), jnp.float32, -bound2, bound2)
    return w1, b1, w2, b2


if __name__ == "__main__":
    batch = 8
    input_size = 32
    hidden_size = 128
    output_size = 16

    key = jax.random.PRNGKey(0)
    kx, kp = jax.random.split(key)
    x = jax.random.normal(kx, (batch, input_size), dtype=jnp.float32)
    w1, b1, w2, b2 = init_params(kp, input_size, output_size, hidden_size)

    out = net_forward(x, w1, b1, w2, b2)
    out = jax.block_until_ready(out)

    # Pure-JAX reference with matching bf16-input / f32-accumulation numerics
    # (eval-mode dropout == identity).
    h_ref = jnp.dot(x.astype(jnp.bfloat16), w1.astype(jnp.bfloat16),
                    preferred_element_type=jnp.float32) + b1
    h_ref = jnp.maximum(h_ref, 0.0)
    ref = jnp.dot(h_ref.astype(jnp.bfloat16), w2.astype(jnp.bfloat16),
                  preferred_element_type=jnp.float32) + b2

    assert out.shape == (batch, output_size)
    assert jnp.allclose(out, ref, atol=1e-2, rtol=1e-2), (
        float(jnp.max(jnp.abs(out - ref))))

    print("KERNEL_OK")
</pallas_src>

<mosaic_0001>
module attributes {stable_mosaic.version = 11 : i64} {
  func.func @mlp_kernel(%arg0: i32, %arg1: memref<8x128xbf16, #tpu.memory_space<vmem>>, %arg2: memref<128x128xbf16, #tpu.memory_space<vmem>>, %arg3: memref<1x128xf32, #tpu.memory_space<vmem>>, %arg4: memref<128x128xbf16, #tpu.memory_space<vmem>>, %arg5: memref<1x128xf32, #tpu.memory_space<vmem>>, %arg6: memref<8x128xf32, #tpu.memory_space<vmem>>) attributes {dimension_semantics = [#tpu.dimension_semantics<parallel>], iteration_bounds = array<i64: 1>, scalar_prefetch = 0 : i64, scratch_operands = 0 : i64, tpu.core_type = #tpu.core_type<tc>, window_params = [{transform_indices = @transform_0, window_bounds = array<i64: 8, 128>}, {pipeline_mode = #tpu.pipeline_mode<synchronous>, transform_indices = @transform_1, window_bounds = array<i64: 128, 128>}, {pipeline_mode = #tpu.pipeline_mode<synchronous>, transform_indices = @transform_2, window_bounds = array<i64: 1, 128>}, {pipeline_mode = #tpu.pipeline_mode<synchronous>, transform_indices = @transform_3, window_bounds = array<i64: 128, 128>}, {pipeline_mode = #tpu.pipeline_mode<synchronous>, transform_indices = @transform_4, window_bounds = array<i64: 1, 128>}, {transform_indices = @transform_5, window_bounds = array<i64: 8, 128>}]} {
    %c0 = arith.constant 0 : index
    %c0_0 = arith.constant 0 : index
    %0 = vector.load %arg1[%c0, %c0_0] : memref<8x128xbf16, #tpu.memory_space<vmem>>, vector<8x128xbf16>
    %c0_1 = arith.constant 0 : index
    %c0_2 = arith.constant 0 : index
    %1 = vector.load %arg2[%c0_1, %c0_2] : memref<128x128xbf16, #tpu.memory_space<vmem>>, vector<128x128xbf16>
    %cst = arith.constant dense<0.000000e+00> : vector<8x128xf32>
    %2 = tpu.matmul %0, %1, %cst {dimension_numbers = #tpu.dot_dimension_numbers<[1], [0], [0], [1], [0, 0, 1, 1], [], []>} : vector<8x128xbf16>, vector<128x128xbf16>, vector<8x128xf32> -> vector<8x128xf32>
    %c0_3 = arith.constant 0 : index
    %c0_4 = arith.constant 0 : index
    %3 = vector.load %arg3[%c0_3, %c0_4] : memref<1x128xf32, #tpu.memory_space<vmem>>, vector<1x128xf32>
    %4 = vector.broadcast %3 : vector<1x128xf32> to vector<8x128xf32>
    %5 = arith.addf %2, %4 : vector<8x128xf32>
    %cst_5 = arith.constant 0.000000e+00 : f32
    %6 = vector.broadcast %cst_5 : f32 to vector<8x128xf32>
    %7 = arith.maximumf %5, %6 : vector<8x128xf32>
    %8 = arith.truncf %7 : vector<8x128xf32> to vector<8x128xbf16>
    %c0_6 = arith.constant 0 : index
    %c0_7 = arith.constant 0 : index
    %9 = vector.load %arg4[%c0_6, %c0_7] : memref<128x128xbf16, #tpu.memory_space<vmem>>, vector<128x128xbf16>
    %cst_8 = arith.constant dense<0.000000e+00> : vector<8x128xf32>
    %10 = tpu.matmul %8, %9, %cst_8 {dimension_numbers = #tpu.dot_dimension_numbers<[1], [0], [0], [1], [0, 0, 1, 1], [], []>} : vector<8x128xbf16>, vector<128x128xbf16>, vector<8x128xf32> -> vector<8x128xf32>
    %c0_9 = arith.constant 0 : index
    %c0_10 = arith.constant 0 : index
    %11 = vector.load %arg5[%c0_9, %c0_10] : memref<1x128xf32, #tpu.memory_space<vmem>>, vector<1x128xf32>
    %12 = vector.broadcast %11 : vector<1x128xf32> to vector<8x128xf32>
    %13 = arith.addf %10, %12 : vector<8x128xf32>
    %c0_11 = arith.constant 0 : index
    %c0_12 = arith.constant 0 : index
    %14 = vector.load %arg6[%c0_11, %c0_12] : memref<8x128xf32, #tpu.memory_space<vmem>>, vector<8x128xf32>
    tpu.vector_store %arg6[%c0_11, %c0_12], %13 {strides = array<i32>} : memref<8x128xf32, #tpu.memory_space<vmem>>, vector<8x128xf32>,
    return
  }
  func.func @transform_0(%arg0: i32) -> (i32, i32) {
    %c0_i32 = arith.constant 0 : i32
    %c0_i32_0 = arith.constant 0 : i32
    return %arg0, %c0_i32 : i32, i32
  }
  func.func @transform_1(%arg0: i32) -> (i32, i32) {
    %c0_i32 = arith.constant 0 : i32
    %c0_i32_0 = arith.constant 0 : i32
    %c0_i32_1 = arith.constant 0 : i32
    return %c0_i32, %c0_i32_0 : i32, i32
  }
  func.func @transform_2(%arg0: i32) -> (i32, i32) {
    %c0_i32 = arith.constant 0 : i32
    %c0_i32_0 = arith.constant 0 : i32
    %c0_i32_1 = arith.constant 0 : i32
    return %c0_i32, %c0_i32_0 : i32, i32
  }
  func.func @transform_3(%arg0: i32) -> (i32, i32) {
    %c0_i32 = arith.constant 0 : i32
    %c0_i32_0 = arith.constant 0 : i32
    %c0_i32_1 = arith.constant 0 : i32
    return %c0_i32, %c0_i32_0 : i32, i32
  }
  func.func @transform_4(%arg0: i32) -> (i32, i32) {
    %c0_i32 = arith.constant 0 : i32
    %c0_i32_0 = arith.constant 0 : i32
    %c0_i32_1 = arith.constant 0 : i32
    return %c0_i32, %c0_i32_0 : i32, i32
  }
  func.func @transform_5(%arg0: i32) -> (i32, i32) {
    %c0_i32 = arith.constant 0 : i32
    %c0_i32_0 = arith.constant 0 : i32
    return %arg0, %c0_i32 : i32, i32
  }
}

</mosaic_0001>

<llo_original>
// kernel: tpu_custom_call.1
$region0: #{tpu_custom_call.1}
  #allocation0 [shape = 'u32[]', space=smem, size = 0x4, offset = 0x4, fixed_abs, tag = 'smem constant byte address 0x4 - core index']
  #allocation1 [shape = 'u32[144,128]{1,0:T(1,128)}', space=vmem, size = 0x12000, scoped, tag = 'internal scratch']
  %s0 = inlined_call_operand.hbm [shape: bf16[8,128], index: 0, kind: input, shape index: {}]
  %s1 = inlined_call_operand.hbm [shape: bf16[128,128], index: 1, kind: input, shape index: {}]
  %s2 = inlined_call_operand.vmem [shape: f32[1,128], index: 2, kind: input, shape index: {}]
  %s3 = inlined_call_operand.hbm [shape: bf16[128,128], index: 3, kind: input, shape index: {}]
  %s4 = inlined_call_operand.vmem [shape: f32[1,128], index: 4, kind: input, shape index: {}]
  %s5 = inlined_call_operand.hbm [shape: f32[8,128], index: 5, kind: output, shape index: {}]
  %s6 = sld [smem:[#allocation0]]
  $region42: #{tpu_custom_call.1} parent=0
    _
  %s8 = ssub.s32 1, %s6
  %s9 = scalar_select 0, %s8, %s6
  $region1: #{tpu_custom_call.1} parent=0
    #allocation2 [shape = 'u8[2048]{0}', space=vmem, size = 0x800, scoped, tag = 'input window, operand 0, single buffered']
    #allocation3 [shape = 's32[1]{0}', space=sflag, size = 0x4, scoped, tag = 'scoped memory for tpu_custom_call.1']
    #allocation4 [shape = 's32[1]{0}', space=sflag, size = 0x4, scoped, tag = 'scoped memory for tpu_custom_call.1']
    #allocation5 [shape = 'u8[32768]{0}', space=vmem, size = 0x8000, scoped, tag = 'input window, operand 1, single buffered']
    #allocation6 [shape = 's32[1]{0}', space=sflag, size = 0x4, scoped, tag = 'scoped memory for tpu_custom_call.1']
    #allocation7 [shape = 'u8[32768]{0}', space=vmem, size = 0x8000, scoped, tag = 'input window, operand 3, single buffered']
    #allocation8 [shape = 'u8[4096]{0}', space=vmem, size = 0x1000, scoped, tag = 'output window, operand 0, single buffered']
    %10 = vsyncpa [#allocation3], 0
    %11 = vsyncpa [#allocation6], 0
    %12 = vsyncpa [#allocation4], 0
    // Predicated region
    $region2: #{tpu_custom_call.1} parent=1 // pred_check
      _
    $region3: #{tpu_custom_call.1} parent=1 // pred_check_branch
      %14 = sbr.rel (0) target = $region5
    $region4: #{tpu_custom_call.1} parent=1 // pred_region
      %s16 = ssub.s32 64, 64
      %17 = vsyncadd [#allocation3], %s16
      %s19 = sshll.u32 [#allocation2], 4
      %s20 = int_to_ptr.vmem [resolvable:$true] %s19
      %22 = dma.hbm_to_vmem [thread:$0]  %s0, 64, %s20, [#allocation3]
    $region5: #{tpu_custom_call.1} parent=1 // pred_fallthru
      _
    // Predicated region
    $region6: #{tpu_custom_call.1} parent=1 // pred_check
      _
    $region7: #{tpu_custom_call.1} parent=1 // pred_check_branch
      %24 = sbr.rel (0) target = $region9
    $region8: #{tpu_custom_call.1} parent=1 // pred_region
      %s26 = ssub.s32 1024, 1024
      %27 = vsyncadd [#allocation6], %s26
      %s28 = sshll.u32 [#allocation5], 4
      %s29 = int_to_ptr.vmem [resolvable:$true] %s28
      %34 = dma.hbm_to_vmem [thread:$0]  %s1, 1024, %s29, [#allocation6], 64, 64, 4
    $region9: #{tpu_custom_call.1} parent=1 // pred_fallthru
      _
    // Predicated region
    $region10: #{tpu_custom_call.1} parent=1 // pred_check
      _
    $region11: #{tpu_custom_call.1} parent=1 // pred_check_branch
      %36 = sbr.rel (0) target = $region13
    $region12: #{tpu_custom_call.1} parent=1 // pred_region
      _
    $region13: #{tpu_custom_call.1} parent=1 // pred_fallthru
      _
    // Predicated region
    $region14: #{tpu_custom_call.1} parent=1 // pred_check
      _
    $region15: #{tpu_custom_call.1} parent=1 // pred_check_branch
      %38 = sbr.rel (0) target = $region17
    $region16: #{tpu_custom_call.1} parent=1 // pred_region
      %s40 = ssub.s32 1024, 1024
      %41 = vsyncadd [#allocation6], %s40
      %s42 = sshll.u32 [#allocation7], 4
      %s43 = int_to_ptr.vmem [resolvable:$true] %s42
      %48 = dma.hbm_to_vmem [thread:$0]  %s3, 1024, %s43, [#allocation6], 64, 64, 4
    $region17: #{tpu_custom_call.1} parent=1 // pred_fallthru
      _
    // Predicated region
    $region18: #{tpu_custom_call.1} parent=1 // pred_check
      _
    $region19: #{tpu_custom_call.1} parent=1 // pred_check_branch
      %50 = sbr.rel (0) target = $region21
    $region20: #{tpu_custom_call.1} parent=1 // pred_region
      _
    $region21: #{tpu_custom_call.1} parent=1 // pred_fallthru
      _
    // Predicated region
    $region22: #{tpu_custom_call.1} parent=1 // pred_check
      _
    $region23: #{tpu_custom_call.1} parent=1 // pred_check_branch
      %52 = sbr.rel (0) target = $region25
    $region24: #{tpu_custom_call.1} parent=1 // pred_region
      %53 = dma.done [#allocation3], 64
    $region25: #{tpu_custom_call.1} parent=1 // pred_fallthru
      _
    // Predicated region
    $region26: #{tpu_custom_call.1} parent=1 // pred_check
      _
    $region27: #{tpu_custom_call.1} parent=1 // pred_check_branch
      %55 = sbr.rel (0) target = $region29
    $region28: #{tpu_custom_call.1} parent=1 // pred_region
      %56 = dma.done [#allocation6], 1024
    $region29: #{tpu_custom_call.1} parent=1 // pred_fallthru
      _
    // Predicated region
    $region30: #{tpu_custom_call.1} parent=1 // pred_check
      _
    $region31: #{tpu_custom_call.1} parent=1 // pred_check_branch
      %58 = sbr.rel (0) target = $region33
    $region32: #{tpu_custom_call.1} parent=1 // pred_region
      %59 = dma.done [#allocation6], 1024
    $region33: #{tpu_custom_call.1} parent=1 // pred_fallthru
      _
    %v61 = vld [vmem:[#allocation2] sm:$0xf]
    %v62 = vld [vmem:[#allocation5] sm:$0xf]
    %v63 = vld [vmem:[#allocation5 + $0x4] sm:$0xf]
    %v64 = vld [vmem:[#allocation5 + $0x8] sm:$0xf]
    %v65 = vld [vmem:[#allocation5 + $0xc] sm:$0xf]
    %v66 = vld [vmem:[#allocation5 + $0x10] sm:$0xf]
    %v67 = vld [vmem:[#allocation5 + $0x14] sm:$0xf]
    %v68 = vld [vmem:[#allocation5 + $0x18] sm:$0xf]
    %v69 = vld [vmem:[#allocation5 + $0x1c] sm:$0xf]
    %v70 = vld [vmem:[#allocation5 + $0x20] sm:$0xf]
    %v71 = vld [vmem:[#allocation5 + $0x24] sm:$0xf]
    %v72 = vld [vmem:[#allocation5 + $0x28] sm:$0xf]
    %v73 = vld [vmem:[#allocation5 + $0x2c] sm:$0xf]
    %v74 = vld [vmem:[#allocation5 + $0x30] sm:$0xf]
    %v75 = vld [vmem:[#allocation5 + $0x34] sm:$0xf]
    %v76 = vld [vmem:[#allocation5 + $0x38] sm:$0xf]
    %v77 = vld [vmem:[#allocation5 + $0x3c] sm:$0xf]
    %v78 = vld [vmem:[%s2] sm:$0x1]
    %v80 = vlaneseq
    %v81 = vshrl.u32 %v80, 7
    %v82 = vsub.s32 0, %v81
    %v83 = vrot.slane %v78, %v82
    %v101 = vunpack.c.l.b16 %v62
    %v102 = vunpack.c.l.b16 %v63
    %v103 = vunpack.c.l.b16 %v64
    %v104 = vunpack.c.l.b16 %v65
    %v105 = vunpack.c.l.b16 %v66
    %v106 = vunpack.c.l.b16 %v67
    %v107 = vunpack.c.l.b16 %v68
    %v108 = vunpack.c.l.b16 %v69
    %v109 = vunpack.c.l.b16 %v70
    %v110 = vunpack.c.l.b16 %v71
    %v111 = vunpack.c.l.b16 %v72
    %v112 = vunpack.c.l.b16 %v73
    %v113 = vunpack.c.l.b16 %v74
    %v114 = vunpack.c.l.b16 %v75
    %v115 = vunpack.c.l.b16 %v76
    %v116 = vunpack.c.l.b16 %v77
    %v117 = vpack.c.b16 %v102, %v101
    %v118 = vpack.c.b16 %v104, %v103
    %v119 = vpack.c.b16 %v106, %v105
    %v120 = vpack.c.b16 %v108, %v107
    %v121 = vpack.c.b16 %v110, %v109
    %v122 = vpack.c.b16 %v112, %v111
    %v123 = vpack.c.b16 %v114, %v113
    %v124 = vpack.c.b16 %v116, %v115
    %133 = vmatprep.subr.bf16.mxu0 0
    %134 = vmatpush1.bf16.msra.mxu0 %v117
    %135 = vmatprep.subr.bf16.mxu0 0
    %136 = vmatpush1.bf16.msra.mxu0 %v118
    %137 = vmatprep.subr.bf16.mxu0 0
    %138 = vmatpush1.bf16.msra.mxu0 %v119
    %139 = vmatprep.subr.bf16.mxu0 0
    %140 = vmatpush1.bf16.msra.mxu0 %v120
    %141 = vmatprep.subr.bf16.mxu0 0
    %142 = vmatpush1.bf16.msra.mxu0 %v121
    %143 = vmatprep.subr.bf16.mxu0 0
    %144 = vmatpush1.bf16.msra.mxu0 %v122
    %145 = vmatprep.subr.bf16.mxu0 0
    %146 = vmatpush1.bf16.msra.mxu0 %v123
    %147 = vmatprep.subr.bf16.mxu0 0
    %148 = vmatpush1.bf16.msra.mxu0 %v124
    %149 = vmatprep.subr.bf16.mxu0 0
    %150 = vmatpush1.bf16.msra.mxu0 0
    %151 = vmatprep.subr.bf16.mxu0 0
    %152 = vmatpush1.bf16.msra.mxu0 0
    %153 = vmatprep.subr.bf16.mxu0 0
    %154 = vmatpush1.bf16.msra.mxu0 0
    %155 = vmatprep.subr.bf16.mxu0 0
    %156 = vmatpush1.bf16.msra.mxu0 0
    %157 = vmatprep.subr.bf16.mxu0 0
    %158 = vmatpush1.bf16.msra.mxu0 0
    %159 = vmatprep.subr.bf16.mxu0 0
    %160 = vmatpush1.bf16.msra.mxu0 0
    %161 = vmatprep.subr.bf16.mxu0 0
    %162 = vmatpush1.bf16.msra.mxu0 0
    %163 = vmatprep.subr.bf16.mxu0 0
    %164 = vmatpush1.bf16.msra.mxu0 0
    %165 = vmatprep.mubr.bf16.mxu0 0
    %166 = vmatmul.mubr.bf16.gmra.mrb[0].mxu0 %v61
    %v167 = vpop.f32.mrb[0].mxu0
    %v168 = vadd.f32 %v83, %v167
    %v169 = vpop.f32.mrb[0].mxu0
    %v170 = vpop.f32.mrb[0].mxu0
    %v171 = vpop.f32.mrb[0].mxu0
    %172 = vdwg.mxu0
    %v173 = vmax.f32 %v168, 0.0
    %v174 = vpack.c.bf16 %v173, %v173
    %v175 = vld [vmem:[#allocation7] sm:$0xf]
    %v176 = vld [vmem:[#allocation7 + $0x4] sm:$0xf]
    %v177 = vld [vmem:[#allocation7 + $0x8] sm:$0xf]
    %v178 = vld [vmem:[#allocation7 + $0xc] sm:$0xf]
    %v179 = vld [vmem:[#allocation7 + $0x10] sm:$0xf]
    %v180 = vld [vmem:[#allocation7 + $0x14] sm:$0xf]
    %v181 = vld [vmem:[#allocation7 + $0x18] sm:$0xf]
    %v182 = vld [vmem:[#allocation7 + $0x1c] sm:$0xf]
    %v183 = vld [vmem:[#allocation7 + $0x20] sm:$0xf]
    %v184 = vld [vmem:[#allocation7 + $0x24] sm:$0xf]
    %v185 = vld [vmem:[#allocation7 + $0x28] sm:$0xf]
    %v186 = vld [vmem:[#allocation7 + $0x2c] sm:$0xf]
    %v187 = vld [vmem:[#allocation7 + $0x30] sm:$0xf]
    %v188 = vld [vmem:[#allocation7 + $0x34] sm:$0xf]
    %v189 = vld [vmem:[#allocation7 + $0x38] sm:$0xf]
    %v190 = vld [vmem:[#allocation7 + $0x3c] sm:$0xf]
    %v191 = vld [vmem:[%s4] sm:$0x1]
    %v193 = vlaneseq
    %v194 = vshrl.u32 %v193, 7
    %v195 = vsub.s32 0, %v194
    %v196 = vrot.slane %v191, %v195
    %v214 = vunpack.c.l.b16 %v175
    %v215 = vunpack.c.l.b16 %v176
    %v216 = vunpack.c.l.b16 %v177
    %v217 = vunpack.c.l.b16 %v178
    %v218 = vunpack.c.l.b16 %v179
    %v219 = vunpack.c.l.b16 %v180
    %v220 = vunpack.c.l.b16 %v181
    %v221 = vunpack.c.l.b16 %v182
    %v222 = vunpack.c.l.b16 %v183
    %v223 = vunpack.c.l.b16 %v184
    %v224 = vunpack.c.l.b16 %v185
    %v225 = vunpack.c.l.b16 %v186
    %v226 = vunpack.c.l.b16 %v187
    %v227 = vunpack.c.l.b16 %v188
    %v228 = vunpack.c.l.b16 %v189
    %v229 = vunpack.c.l.b16 %v190
    %v230 = vpack.c.b16 %v215, %v214
    %v231 = vpack.c.b16 %v217, %v216
    %v232 = vpack.c.b16 %v219, %v218
    %v233 = vpack.c.b16 %v221, %v220
    %v234 = vpack.c.b16 %v223, %v222
    %v235 = vpack.c.b16 %v225, %v224
    %v236 = vpack.c.b16 %v227, %v226
    %v237 = vpack.c.b16 %v229, %v228
    %246 = vmatprep.subr.bf16.mxu0 0
    %247 = vmatpush1.bf16.msra.mxu0 %v230
    %248 = vmatprep.subr.bf16.mxu0 0
    %249 = vmatpush1.bf16.msra.mxu0 %v231
    %250 = vmatprep.subr.bf16.mxu0 0
    %251 = vmatpush1.bf16.msra.mxu0 %v232
    %252 = vmatprep.subr.bf16.mxu0 0
    %253 = vmatpush1.bf16.msra.mxu0 %v233
    %254 = vmatprep.subr.bf16.mxu0 0
    %255 = vmatpush1.bf16.msra.mxu0 %v234
    %256 = vmatprep.subr.bf16.mxu0 0
    %257 = vmatpush1.bf16.msra.mxu0 %v235
    %258 = vmatprep.subr.bf16.mxu0 0
    %259 = vmatpush1.bf16.msra.mxu0 %v236
    %260 = vmatprep.subr.bf16.mxu0 0
    %261 = vmatpush1.bf16.msra.mxu0 %v237
    %262 = vmatprep.subr.bf16.mxu0 0
    %263 = vmatpush1.bf16.msra.mxu0 0
    %264 = vmatprep.subr.bf16.mxu0 0
    %265 = vmatpush1.bf16.msra.mxu0 0
    %266 = vmatprep.subr.bf16.mxu0 0
    %267 = vmatpush1.bf16.msra.mxu0 0
    %268 = vmatprep.subr.bf16.mxu0 0
    %269 = vmatpush1.bf16.msra.mxu0 0
    %270 = vmatprep.subr.bf16.mxu0 0
    %271 = vmatpush1.bf16.msra.mxu0 0
    %272 = vmatprep.subr.bf16.mxu0 0
    %273 = vmatpush1.bf16.msra.mxu0 0
    %274 = vmatprep.subr.bf16.mxu0 0
    %275 = vmatpush1.bf16.msra.mxu0 0
    %276 = vmatprep.subr.bf16.mxu0 0
    %277 = vmatpush1.bf16.msra.mxu0 0
    %278 = vmatprep.mubr.bf16.mxu0 0
    %279 = vmatmul.mubr.bf16.gmra.mrb[0].mxu0 %v174
    %v280 = vpop.f32.mrb[0].mxu0
    %v281 = vadd.f32 %v196, %v280
    %v282 = vpop.f32.mrb[0].mxu0
    %v283 = vpop.f32.mrb[0].mxu0
    %v284 = vpop.f32.mrb[0].mxu0
    %285 = vdwg.mxu0
    %286 = vst [vmem:[#allocation8] sm:$0xff] %v281
    // Predicated region
    $region34: #{tpu_custom_call.1} parent=1 // pred_check
      _
    $region35: #{tpu_custom_call.1} parent=1 // pred_check_branch
      %288 = sbr.rel (0) target = $region37
    $region36: #{tpu_custom_call.1} parent=1 // pred_region
      %s290 = ssub.s32 128, 128
      %291 = vsyncadd [#allocation4], %s290
      %s293 = sshll.u32 [#allocation8], 4
      %s294 = int_to_ptr.vmem [resolvable:$true] %s293
      %296 = dma.vmem_to_hbm [thread:$0]  %s294, 128, %s5, [#allocation4]
    $region37: #{tpu_custom_call.1} parent=1 // pred_fallthru
      _
    // Predicated region
    $region38: #{tpu_custom_call.1} parent=1 // pred_check
      _
    $region39: #{tpu_custom_call.1} parent=1 // pred_check_branch
      %298 = sbr.rel (0) target = $region41
    $region40: #{tpu_custom_call.1} parent=1 // pred_region
      %299 = dma.done [#allocation4], 128
    $region41: #{tpu_custom_call.1} parent=1 // pred_fallthru
      _
    %300 = vsyncpa [#allocation3], 1
    %301 = vsyncpa [#allocation6], 1
    %302 = vsyncpa [#allocation4], 1

</llo_original>
